<compile_context>
chip_gen: v7x
topology: tpu7x:2x2x1
jax: 0.10.0
libtpu: 0.0.40
codegen_flags: <defaults>
</compile_context>

<pallas_src>
import math
import functools

import jax
import jax.numpy as jnp
from jax.experimental import pallas as pl
from jax.experimental.pallas import tpu as pltpu


# Safe on every generation: v5e/v6e have 128 MiB physical VMEM, v7x has 64 MiB.
_VMEM_LIMIT_BYTES = 48 * 1024 * 1024


def _pick_tile(dim, desired, granule):
    """Largest multiple of `granule` that divides `dim` and is <= `desired`.

    Falls back to the full dim (a full-extent block always satisfies the TPU
    (8, 128) layout constraint and keeps the grid exact, no padding garbage).
    """
    if dim <= desired:
        return dim
    t = (desired // granule) * granule
    while t >= granule:
        if dim % t == 0:
            return t
        t -= granule
    return dim


# ----------------------------- tiled linear ---------------------------------


def _linear_kernel(x_ref, wT_ref, b_ref, o_ref, acc_ref):
    k = pl.program_id(2)

    @pl.when(k == 0)
    def _init():
        acc_ref[...] = jnp.zeros_like(acc_ref)

    # [tm, tk] @ [tk, tn] -> f32 accumulator (operands stay in native dtype).
    acc_ref[...] += jnp.dot(
        x_ref[...], wT_ref[...], preferred_element_type=jnp.float32
    )

    @pl.when(k == pl.num_programs(2) - 1)
    def _finalize():
        # Bias added once per output tile (not per K step).
        o_ref[...] = (acc_ref[...] + b_ref[...].astype(jnp.float32)).astype(
            o_ref.dtype
        )


def linear_pallas(x2d, wT, b, *, tm=256, tn=256, tk=512):
    """y = x2d @ wT + b.  x2d: (M, K), wT: (K, N) pre-transposed, b: (N,)."""
    M, K = x2d.shape
    K2, N = wT.shape
    assert K == K2
    tm = _pick_tile(M, tm, 8)
    tn = _pick_tile(N, tn, 128)
    tk = _pick_tile(K, tk, 128)
    grid = (M // tm, N // tn, K // tk)
    return pl.pallas_call(
        _linear_kernel,
        out_shape=jax.ShapeDtypeStruct((M, N), x2d.dtype),
        grid=grid,
        in_specs=[
            pl.BlockSpec((tm, tk), lambda i, j, k: (i, k)),
            pl.BlockSpec((tk, tn), lambda i, j, k: (k, j)),
            pl.BlockSpec((1, tn), lambda i, j, k: (0, j)),
        ],
        out_specs=pl.BlockSpec((tm, tn), lambda i, j, k: (i, j)),
        scratch_shapes=[pltpu.VMEM((tm, tn), jnp.float32)],
        compiler_params=pltpu.CompilerParams(
            dimension_semantics=("parallel", "parallel", "arbitrary"),
            vmem_limit_bytes=_VMEM_LIMIT_BYTES,
        ),
    )(x2d, wT, b.reshape(1, N))


# ----------------------- flash-style multi-head attention -------------------


def _flash_attn_kernel(q_ref, k_ref, v_ref, o_ref, m_sc, l_sc, acc_sc, *, scale):
    ki = pl.program_id(2)

    @pl.when(ki == 0)
    def _init():
        m_sc[...] = jnp.full_like(m_sc, -jnp.inf)
        l_sc[...] = jnp.zeros_like(l_sc)
        acc_sc[...] = jnp.zeros_like(acc_sc)

    # Scale the (H, tq, D) operand instead of the (H, tq, tkv) score matrix.
    q = q_ref[...] * scale
    k = k_ref[...]
    v = v_ref[...]

    # Scores in f32 on the MXU; operands stay in their native (bf16-ready) dtype.
    s = jnp.einsum("hqd,hkd->hqk", q, k, preferred_element_type=jnp.float32)

    m_prev = m_sc[...]
    m_new = jnp.maximum(m_prev, jnp.max(s, axis=-1, keepdims=True))
    alpha = jnp.exp(m_prev - m_new)
    p = jnp.exp(s - m_new)
    l_sc[...] = alpha * l_sc[...] + jnp.sum(p, axis=-1, keepdims=True)
    acc_sc[...] = alpha * acc_sc[...] + jnp.einsum(
        "hqk,hkd->hqd", p.astype(v.dtype), v, preferred_element_type=jnp.float32
    )
    m_sc[...] = m_new

    @pl.when(ki == pl.num_programs(2) - 1)
    def _finalize():
        # Deferred normalization: one approx reciprocal (EUP) applied to the
        # (H, tq, D) accumulator, not a divide over the full score matrix.
        inv_l = pl.reciprocal(l_sc[...], approx=True)
        o_ref[...] = (acc_sc[...] * inv_l).astype(o_ref.dtype)


def attention_pallas(q, k, v, head_dim, *, tq=256, tkv=128):
    """q, k, v: (B, H, S, D) -> (B, H, S, D), softmax(QK^T/sqrt(D)) V.

    All H heads of a batch are processed per grid step; the KV axis is a grid
    reduction axis with online-softmax state kept in VMEM scratch.
    """
    B, H, S, D = q.shape
    tq = _pick_tile(S, tq, 8)
    tkv = _pick_tile(S, tkv, 8)
    scale = 1.0 / math.sqrt(head_dim)
    kernel = functools.partial(_flash_attn_kernel, scale=scale)

    q_spec = pl.BlockSpec((None, H, tq, D), lambda b, qi, ki: (b, 0, qi, 0))
    kv_spec = pl.BlockSpec((None, H, tkv, D), lambda b, qi, ki: (b, 0, ki, 0))

    # TODO(synk): with head_dim << 128 the per-head last dim underfills the
    # 128-lane vregs; packing heads along lanes would require a block-diagonal
    # score trick and is not done here.
    return pl.pallas_call(
        kernel,
        out_shape=jax.ShapeDtypeStruct((B, H, S, D), q.dtype),
        grid=(B, S // tq, S // tkv),
        in_specs=[q_spec, kv_spec, kv_spec],
        out_specs=q_spec,
        scratch_shapes=[
            pltpu.VMEM((H, tq, 1), jnp.float32),  # running max m
            pltpu.VMEM((H, tq, 1), jnp.float32),  # running denom l
            pltpu.VMEM((H, tq, D), jnp.float32),  # output accumulator
        ],
        compiler_params=pltpu.CompilerParams(
            dimension_semantics=("parallel", "parallel", "arbitrary"),
            vmem_limit_bytes=_VMEM_LIMIT_BYTES,
        ),
    )(q, k, v)


# ------------------------------ Module wrapper -------------------------------


class MultiheadLSHAttentionPallas:
    """Pallas re-implementation of MultiheadLSHAttention.forward."""

    def __init__(self, embed_dim, num_heads=8, num_hashes=8, *, key):
        assert num_hashes % 2 == 0, "Number of hashes must be even"
        assert embed_dim % num_heads == 0, "Heads must divide embed dim"
        self.embed_dim = embed_dim
        self.num_heads = num_heads
        self.head_embed_dim = embed_dim // num_heads
        self.num_hashes = num_hashes

        ks = jax.random.split(key, 7)
        bound = 1.0 / math.sqrt(embed_dim)

        def u(k, shape):
            return jax.random.uniform(
                k, shape, jnp.float32, minval=-bound, maxval=bound
            )

        # nn.Linear params, PyTorch convention (weight: (out, in), bias: (out,)).
        self.w_qk = u(ks[0], (embed_dim, embed_dim))
        self.b_qk = u(ks[1], (embed_dim,))
        self.w_v = u(ks[2], (embed_dim, embed_dim))
        self.b_v = u(ks[3], (embed_dim,))
        self.w_out = u(ks[4], (embed_dim, embed_dim))
        self.b_out = u(ks[5], (embed_dim,))

        # One-time pre-transposed copies so the kernels do a plain [M,K]@[K,N].
        self.w_qk_T = self.w_qk.T
        self.w_v_T = self.w_v.T
        self.w_out_T = self.w_out.T

        # hash_matrix buffer: registered but unused by the returned value.
        self.hash_matrix = jax.random.normal(
            ks[6], (self.head_embed_dim, num_hashes // 2), jnp.float32
        )
        # TODO(synk): the reference forward only uses hash_matrix in debug
        # prints; it never affects the output, so it is not part of the kernel.

    def __call__(self, Q, K, V):
        B, S, E = Q.shape
        H, D = self.num_heads, self.head_embed_dim

        # Fused Q/K projection: one tiled matmul streams w_qk once for both.
        qk_in = jnp.concatenate(
            [Q.reshape(B * S, E), K.reshape(B * S, E)], axis=0
        )
        qk_out = linear_pallas(qk_in, self.w_qk_T, self.b_qk)
        qp, kp = qk_out[: B * S], qk_out[B * S:]
        vp = linear_pallas(V.reshape(B * S, E), self.w_v_T, self.b_v)

        # _split_heads: pure view (B, S, E) -> (B, H, S, D), exactly as the
        # reference module does it (a reshape, NOT a transpose-based split).
        qh = qp.reshape(B, H, S, D)
        kh = kp.reshape(B, H, S, D)
        vh = vp.reshape(B, H, S, D)

        # Scaled dot-product attention + online softmax (Pallas, per batch,
        # all heads per grid step, KV-tiled).
        oh = attention_pallas(qh, kh, vh, D)

        # _merge_heads: pure view (B, H, S, D) -> (B, S, E) (contiguous).
        om = oh.reshape(B, S, E)

        # TODO(synk): the out-projection could be fused into the attention
        # epilogue to skip one (B,S,E) HBM round trip; kept separate here.
        out = linear_pallas(om.reshape(B * S, E), self.w_out_T, self.b_out)
        return out.reshape(B, S, E)


# ------------------------------ Pure-JAX reference ---------------------------


def reference_forward(module, Q, K, V):
    B, S, E = Q.shape
    H, D = module.num_heads, module.head_embed_dim

    def lin(x, w, b):
        return x @ w.T + b

    qp = lin(Q, module.w_qk, module.b_qk).reshape(B, H, S, D)
    kp = lin(K, module.w_qk, module.b_qk).reshape(B, H, S, D)
    vp = lin(V, module.w_v, module.b_v).reshape(B, H, S, D)
    scores = jnp.einsum("bhqd,bhkd->bhqk", qp, kp) / math.sqrt(D)
    attn = jax.nn.softmax(scores, axis=-1)
    o = jnp.einsum("bhqk,bhkd->bhqd", attn, vp).reshape(B, S, E)
    return lin(o, module.w_out, module.b_out)


# ----------------------------------- main ------------------------------------

if __name__ == "__main__":
    key = jax.random.PRNGKey(0)
    kq, kk, kv, kp = jax.random.split(key, 4)

    B, S, E, num_heads, num_hashes = 2, 8, 32, 8, 8
    Q = jax.random.normal(kq, (B, S, E), jnp.float32)
    K = jax.random.normal(kk, (B, S, E), jnp.float32)
    V = jax.random.normal(kv, (B, S, E), jnp.float32)

    module = MultiheadLSHAttentionPallas(E, num_heads, num_hashes, key=kp)

    out = module(Q, K, V)
    out = jax.block_until_ready(out)

    ref = reference_forward(module, Q, K, V)
    assert out.shape == (B, S, E), out.shape
    assert jnp.allclose(out, ref, atol=2e-2, rtol=2e-2), (
        float(jnp.max(jnp.abs(out - ref)))
    )
    print("KERNEL_OK")
</pallas_src>

<mosaic_0001>
module attributes {stable_mosaic.version = 11 : i64} {
  func.func @_linear_kernel(%arg0: i32, %arg1: i32, %arg2: i32, %arg3: memref<32x32xf32, #tpu.memory_space<vmem>>, %arg4: memref<32x32xf32, #tpu.memory_space<vmem>>, %arg5: memref<1x32xf32, #tpu.memory_space<vmem>>, %arg6: memref<32x32xf32, #tpu.memory_space<vmem>>, %arg7: memref<32x32xf32, #tpu.memory_space<vmem>>) attributes {dimension_semantics = [#tpu.dimension_semantics<parallel>, #tpu.dimension_semantics<parallel>, #tpu.dimension_semantics<arbitrary>], iteration_bounds = array<i64: 1, 1, 1>, scalar_prefetch = 0 : i64, scratch_operands = 1 : i64, tpu.core_type = #tpu.core_type<tc>, window_params = [{transform_indices = @transform_0, window_bounds = array<i64: 32, 32>}, {transform_indices = @transform_1, window_bounds = array<i64: 32, 32>}, {transform_indices = @transform_2, window_bounds = array<i64: 1, 32>}, {transform_indices = @transform_3, window_bounds = array<i64: 32, 32>}]} {
    %c0_i32 = arith.constant 0 : i32
    %0 = arith.cmpi eq, %arg2, %c0_i32 : i32
    %1 = arith.extui %0 : i1 to i32
    %c0_i32_0 = arith.constant 0 : i32
    %2 = arith.cmpi ne, %1, %c0_i32_0 : i32
    scf.if %2 {
      %cst_10 = arith.constant 0.000000e+00 : f32
      %12 = vector.broadcast %cst_10 : f32 to vector<32x32xf32>
      %c0_11 = arith.constant 0 : index
      %c0_12 = arith.constant 0 : index
      %13 = vector.load %arg7[%c0_11, %c0_12] : memref<32x32xf32, #tpu.memory_space<vmem>>, vector<32x32xf32>
      tpu.vector_store %arg7[%c0_11, %c0_12], %12 {strides = array<i32>} : memref<32x32xf32, #tpu.memory_space<vmem>>, vector<32x32xf32>,
    } else {
    }
    %c0 = arith.constant 0 : index
    %c0_1 = arith.constant 0 : index
    %3 = vector.load %arg7[%c0, %c0_1] : memref<32x32xf32, #tpu.memory_space<vmem>>, vector<32x32xf32>
    %c0_2 = arith.constant 0 : index
    %c0_3 = arith.constant 0 : index
    %4 = vector.load %arg3[%c0_2, %c0_3] : memref<32x32xf32, #tpu.memory_space<vmem>>, vector<32x32xf32>
    %c0_4 = arith.constant 0 : index
    %c0_5 = arith.constant 0 : index
    %5 = vector.load %arg4[%c0_4, %c0_5] : memref<32x32xf32, #tpu.memory_space<vmem>>, vector<32x32xf32>
    %cst = arith.constant dense<0.000000e+00> : vector<32x32xf32>
    %6 = tpu.matmul %4, %5, %cst {dimension_numbers = #tpu.dot_dimension_numbers<[1], [0], [0], [1], [0, 0, 1, 1], [], []>} : vector<32x32xf32>, vector<32x32xf32>, vector<32x32xf32> -> vector<32x32xf32>
    %7 = arith.addf %3, %6 : vector<32x32xf32>
    %c0_6 = arith.constant 0 : index
    %c0_7 = arith.constant 0 : index
    %8 = vector.load %arg7[%c0_6, %c0_7] : memref<32x32xf32, #tpu.memory_space<vmem>>, vector<32x32xf32>
    tpu.vector_store %arg7[%c0_6, %c0_7], %7 {strides = array<i32>} : memref<32x32xf32, #tpu.memory_space<vmem>>, vector<32x32xf32>,
    %c0_i32_8 = arith.constant 0 : i32
    %9 = arith.cmpi eq, %arg2, %c0_i32_8 : i32
    %10 = arith.extui %9 : i1 to i32
    %c0_i32_9 = arith.constant 0 : i32
    %11 = arith.cmpi ne, %10, %c0_i32_9 : i32
    scf.if %11 {
      %c0_10 = arith.constant 0 : index
      %c0_11 = arith.constant 0 : index
      %12 = vector.load %arg7[%c0_10, %c0_11] : memref<32x32xf32, #tpu.memory_space<vmem>>, vector<32x32xf32>
      %c0_12 = arith.constant 0 : index
      %c0_13 = arith.constant 0 : index
      %13 = vector.load %arg5[%c0_12, %c0_13] : memref<1x32xf32, #tpu.memory_space<vmem>>, vector<1x32xf32>
      %14 = vector.broadcast %13 : vector<1x32xf32> to vector<32x32xf32>
      %15 = arith.addf %12, %14 : vector<32x32xf32>
      %c0_14 = arith.constant 0 : index
      %c0_15 = arith.constant 0 : index
      %16 = vector.load %arg6[%c0_14, %c0_15] : memref<32x32xf32, #tpu.memory_space<vmem>>, vector<32x32xf32>
      tpu.vector_store %arg6[%c0_14, %c0_15], %15 {strides = array<i32>} : memref<32x32xf32, #tpu.memory_space<vmem>>, vector<32x32xf32>,
    } else {
    }
    return
  }
  func.func @transform_0(%arg0: i32, %arg1: i32, %arg2: i32) -> (i32, i32) {
    %c0_i32 = arith.constant 0 : i32
    return %arg0, %arg2 : i32, i32
  }
  func.func @transform_1(%arg0: i32, %arg1: i32, %arg2: i32) -> (i32, i32) {
    %c0_i32 = arith.constant 0 : i32
    return %arg2, %arg1 : i32, i32
  }
  func.func @transform_2(%arg0: i32, %arg1: i32, %arg2: i32) -> (i32, i32) {
    %c0_i32 = arith.constant 0 : i32
    %c0_i32_0 = arith.constant 0 : i32
    return %c0_i32, %arg1 : i32, i32
  }
  func.func @transform_3(%arg0: i32, %arg1: i32, %arg2: i32) -> (i32, i32) {
    %c0_i32 = arith.constant 0 : i32
    return %arg0, %arg1 : i32, i32
  }
}

</mosaic_0001>

<llo_original>
// kernel: tpu_custom_call.1
$region0: #{tpu_custom_call.1}
  #allocation0 [shape = 'u32[]', space=smem, size = 0x4, offset = 0x4, fixed_abs, tag = 'smem constant byte address 0x4 - core index']
  #allocation1 [shape = 'u32[144,128]{1,0:T(1,128)}', space=vmem, size = 0x12000, scoped, tag = 'internal scratch']
  #allocation2 [shape = 'f32[32,32]{1,0:T(8,128)}', space=vmem, size = 0x4000, scoped, tag = 'scratch operand']
  %s0 = inlined_call_operand.hbm [shape: f32[32,32], index: 0, kind: input, shape index: {}]
  %s1 = inlined_call_operand.hbm [shape: f32[32,32], index: 1, kind: input, shape index: {}]
  %s2 = inlined_call_operand.vmem [shape: f32[1,32], index: 2, kind: input, shape index: {}]
  %s3 = inlined_call_operand.hbm [shape: f32[32,32], index: 3, kind: output, shape index: {}]
  %s4 = sld [smem:[#allocation0]]
  $region38: #{tpu_custom_call.1} parent=0
    _
  %s6 = ssub.s32 1, %s4
  %s7 = scalar_select 0, %s6, %s4
  $region1: #{tpu_custom_call.1} parent=0
    #allocation3 [shape = 'u8[16384]{0}', space=vmem, size = 0x4000, scoped, tag = 'input window, operand 0, single buffered']
    #allocation4 [shape = 's32[1]{0}', space=sflag, size = 0x4, scoped, tag = 'scoped memory for tpu_custom_call.1']
    #allocation5 [shape = 's32[1]{0}', space=sflag, size = 0x4, scoped, tag = 'scoped memory for tpu_custom_call.1']
    #allocation6 [shape = 'u8[16384]{0}', space=vmem, size = 0x4000, scoped, tag = 'input window, operand 1, single buffered']
    #allocation7 [shape = 's32[1]{0}', space=sflag, size = 0x4, scoped, tag = 'scoped memory for tpu_custom_call.1']
    #allocation8 [shape = 'u8[16384]{0}', space=vmem, size = 0x4000, scoped, tag = 'output window, operand 0, single buffered']
    %8 = vsyncpa [#allocation4], 0
    %9 = vsyncpa [#allocation7], 0
    %10 = vsyncpa [#allocation5], 0
    // Predicated region
    $region2: #{tpu_custom_call.1} parent=1 // pred_check
      _
    $region3: #{tpu_custom_call.1} parent=1 // pred_check_branch
      %12 = sbr.rel (0) target = $region5
    $region4: #{tpu_custom_call.1} parent=1 // pred_region
      %s14 = ssub.s32 512, 512
      %15 = vsyncadd [#allocation4], %s14
      %s16 = sshll.u32 [#allocation3], 4
      %s17 = int_to_ptr.vmem [resolvable:$true] %s16
      %22 = dma.hbm_to_vmem [thread:$0]  %s0, 512, %s17, [#allocation4], 128, 128, 8
    $region5: #{tpu_custom_call.1} parent=1 // pred_fallthru
      _
    // Predicated region
    $region6: #{tpu_custom_call.1} parent=1 // pred_check
      _
    $region7: #{tpu_custom_call.1} parent=1 // pred_check_branch
      %24 = sbr.rel (0) target = $region9
    $region8: #{tpu_custom_call.1} parent=1 // pred_region
      %s26 = ssub.s32 512, 512
      %27 = vsyncadd [#allocation7], %s26
      %s28 = sshll.u32 [#allocation6], 4
      %s29 = int_to_ptr.vmem [resolvable:$true] %s28
      %34 = dma.hbm_to_vmem [thread:$0]  %s1, 512, %s29, [#allocation7], 128, 128, 8
    $region9: #{tpu_custom_call.1} parent=1 // pred_fallthru
      _
    // Predicated region
    $region10: #{tpu_custom_call.1} parent=1 // pred_check
      _
    $region11: #{tpu_custom_call.1} parent=1 // pred_check_branch
      %36 = sbr.rel (0) target = $region13
    $region12: #{tpu_custom_call.1} parent=1 // pred_region
      _
    $region13: #{tpu_custom_call.1} parent=1 // pred_fallthru
      _
    // Predicated region
    $region14: #{tpu_custom_call.1} parent=1 // pred_check
      _
    $region15: #{tpu_custom_call.1} parent=1 // pred_check_branch
      %38 = sbr.rel (0) target = $region17
    $region16: #{tpu_custom_call.1} parent=1 // pred_region
      %39 = dma.done [#allocation4], 512
    $region17: #{tpu_custom_call.1} parent=1 // pred_fallthru
      _
    // Predicated region
    $region18: #{tpu_custom_call.1} parent=1 // pred_check
      _
    $region19: #{tpu_custom_call.1} parent=1 // pred_check_branch
      %41 = sbr.rel (0) target = $region21
    $region20: #{tpu_custom_call.1} parent=1 // pred_region
      %42 = dma.done [#allocation7], 512
    $region21: #{tpu_custom_call.1} parent=1 // pred_fallthru
      _
    %p43 = scmp.eq.s32.totalorder 0, 0
    // Predicated region
    $region22: #{tpu_custom_call.1} parent=1 // pred_check
      %p44 = pneg %p43
    $region23: #{tpu_custom_call.1} parent=1 // pred_check_branch
      %46 = sbr.rel (%p44) target = $region25
    $region24: #{tpu_custom_call.1} parent=1 // pred_region
      %vm47 = vcmask 261120
      %48 = vst.msk [vmem:[#allocation2] sm:$0xff] %vm47, 0.0
      %49 = vst.msk [vmem:[#allocation2 + $0x8] sm:$0xff] %vm47, 0.0
      %50 = vst.msk [vmem:[#allocation2 + $0x10] sm:$0xff] %vm47, 0.0
      %51 = vst.msk [vmem:[#allocation2 + $0x18] sm:$0xff] %vm47, 0.0
    $region25: #{tpu_custom_call.1} parent=1 // pred_fallthru
      _
    %v52 = vld [vmem:[#allocation2] sm:$0xff]
    %v53 = vld [vmem:[#allocation2 + $0x8] sm:$0xff]
    %v54 = vld [vmem:[#allocation2 + $0x10] sm:$0xff]
    %v55 = vld [vmem:[#allocation2 + $0x18] sm:$0xff]
    %v56 = vld [vmem:[#allocation3] sm:$0xff]
    %v57 = vld [vmem:[#allocation3 + $0x8] sm:$0xff]
    %v58 = vld [vmem:[#allocation3 + $0x10] sm:$0xff]
    %v59 = vld [vmem:[#allocation3 + $0x18] sm:$0xff]
    %v60 = vld [vmem:[#allocation6] sm:$0xff]
    %v61 = vld [vmem:[#allocation6 + $0x8] sm:$0xff]
    %v62 = vld [vmem:[#allocation6 + $0x10] sm:$0xff]
    %v63 = vld [vmem:[#allocation6 + $0x18] sm:$0xff]
    %vm64 = vcmask 261120
    %v66 = vsel %vm64, %v56, 0
    %v69 = vsel %vm64, %v57, 0
    %v72 = vsel %vm64, %v58, 0
    %v75 = vsel %vm64, %v59, 0
    %77 = vmatprep.subr.mxu0 0.0
    %78 = vmatpush1.msra.mxu0 %v60
    %79 = vmatprep.subr.mxu0 0.0
    %80 = vmatpush1.msra.mxu0 %v61
    %81 = vmatprep.subr.mxu0 0.0
    %82 = vmatpush1.msra.mxu0 %v62
    %83 = vmatprep.subr.mxu0 0.0
    %84 = vmatpush1.msra.mxu0 %v63
    %85 = vmatprep.subr.mxu0 0.0
    %86 = vmatpush1.msra.mxu0 0.0
    %87 = vmatprep.subr.mxu0 0.0
    %88 = vmatpush1.msra.mxu0 0.0
    %89 = vmatprep.subr.mxu0 0.0
    %90 = vmatpush1.msra.mxu0 0.0
    %91 = vmatprep.subr.mxu0 0.0
    %92 = vmatpush1.msra.mxu0 0.0
    %93 = vmatprep.subr.mxu0 0.0
    %94 = vmatpush1.msra.mxu0 0.0
    %95 = vmatprep.subr.mxu0 0.0
    %96 = vmatpush1.msra.mxu0 0.0
    %97 = vmatprep.subr.mxu0 0.0
    %98 = vmatpush1.msra.mxu0 0.0
    %99 = vmatprep.subr.mxu0 0.0
    %100 = vmatpush1.msra.mxu0 0.0
    %101 = vmatprep.subr.mxu0 0.0
    %102 = vmatpush1.msra.mxu0 0.0
    %103 = vmatprep.subr.mxu0 0.0
    %104 = vmatpush1.msra.mxu0 0.0
    %105 = vmatprep.subr.mxu0 0.0
    %106 = vmatpush1.msra.mxu0 0.0
    %107 = vmatprep.subr.mxu0 0.0
    %108 = vmatpush1.msra.mxu0 0.0
    %109 = vmatprep.subr.mxu0 0.0
    %110 = vmatpush1.msra.mxu0 0.0
    %111 = vmatprep.subr.mxu0 0.0
    %112 = vmatpush1.msra.mxu0 0.0
    %113 = vmatprep.subr.mxu0 0.0
    %114 = vmatpush1.msra.mxu0 0.0
    %115 = vmatprep.subr.mxu0 0.0
    %116 = vmatpush1.msra.mxu0 0.0
    %117 = vmatprep.subr.mxu0 0.0
    %118 = vmatpush1.msra.mxu0 0.0
    %119 = vmatprep.subr.mxu0 0.0
    %120 = vmatpush1.msra.mxu0 0.0
    %121 = vmatprep.subr.mxu0 0.0
    %122 = vmatpush1.msra.mxu0 0.0
    %123 = vmatprep.subr.mxu0 0.0
    %124 = vmatpush1.msra.mxu0 0.0
    %125 = vmatprep.subr.mxu0 0.0
    %126 = vmatpush1.msra.mxu0 0.0
    %127 = vmatprep.subr.mxu0 0.0
    %128 = vmatpush1.msra.mxu0 0.0
    %129 = vmatprep.subr.mxu0 0.0
    %130 = vmatpush1.msra.mxu0 0.0
    %131 = vmatprep.subr.mxu0 0.0
    %132 = vmatpush1.msra.mxu0 0.0
    %133 = vmatprep.subr.mxu0 0.0
    %134 = vmatpush1.msra.mxu0 0.0
    %135 = vmatprep.subr.mxu0 0.0
    %136 = vmatpush1.msra.mxu0 0.0
    %137 = vmatprep.subr.mxu0 0.0
    %138 = vmatpush1.msra.mxu0 0.0
    %139 = vmatprep.subr.mxu0 0.0
    %140 = vmatpush1.msra.mxu0 0.0
    %141 = vmatprep.mubr.f32.mxu0 0.0
    %142 = vmatmul.mubr.f32.gmra.mrb[0].mxu0 %v66
    %v143 = vpop.f32.mrb[0].mxu0
    %v144 = vadd.f32 0.0, %v143
    %v145 = vpop.f32.mrb[0].mxu0
    %146 = vmatprep.mubr.f32.mxu0 0.0
    %147 = vmatmul.mubr.f32.gmra.mrb[0].mxu0 %v69
    %v148 = vpop.f32.mrb[0].mxu0
    %v149 = vadd.f32 0.0, %v148
    %v150 = vpop.f32.mrb[0].mxu0
    %151 = vmatprep.mubr.f32.mxu0 0.0
    %152 = vmatmul.mubr.f32.gmra.mrb[0].mxu0 %v72
    %v153 = vpop.f32.mrb[0].mxu0
    %v154 = vadd.f32 0.0, %v153
    %v155 = vpop.f32.mrb[0].mxu0
    %156 = vmatprep.mubr.f32.mxu0 0.0
    %157 = vmatmul.mubr.f32.gmra.mrb[0].mxu0 %v75
    %v158 = vpop.f32.mrb[0].mxu0
    %v159 = vadd.f32 0.0, %v158
    %v160 = vpop.f32.mrb[0].mxu0
    %161 = vdwg.mxu0
    %v162 = vadd.f32 %v52, %v144
    %v163 = vadd.f32 %v53, %v149
    %v164 = vadd.f32 %v54, %v154
    %v165 = vadd.f32 %v55, %v159
    %166 = vst.msk [vmem:[#allocation2] sm:$0xff] %vm64, %v162
    %167 = vst.msk [vmem:[#allocation2 + $0x8] sm:$0xff] %vm64, %v163
    %168 = vst.msk [vmem:[#allocation2 + $0x10] sm:$0xff] %vm64, %v164
    %169 = vst.msk [vmem:[#allocation2 + $0x18] sm:$0xff] %vm64, %v165
    // Predicated region
    $region26: #{tpu_custom_call.1} parent=1 // pred_check
      %p170 = pneg %p43
    $region27: #{tpu_custom_call.1} parent=1 // pred_check_branch
      %172 = sbr.rel (%p170) target = $region29
    $region28: #{tpu_custom_call.1} parent=1 // pred_region
      %v173 = vld [vmem:[#allocation2] sm:$0xff]
      %v174 = vld [vmem:[#allocation2 + $0x8] sm:$0xff]
      %v175 = vld [vmem:[#allocation2 + $0x10] sm:$0xff]
      %v176 = vld [vmem:[#allocation2 + $0x18] sm:$0xff]
      %v177 = vld [vmem:[%s2] sm:$0x1]
      %v179 = vlaneseq
      %v180 = vshrl.u32 %v179, 7
      %v181 = vsub.s32 0, %v180
      %v182 = vrot.slane %v177, %v181
      %v184 = vadd.f32 %v173, %v182
      %v185 = vadd.f32 %v174, %v182
      %v186 = vadd.f32 %v175, %v182
      %v187 = vadd.f32 %v176, %v182
      %188 = vst.msk [vmem:[#allocation8] sm:$0xff] %vm64, %v184
      %189 = vst.msk [vmem:[#allocation8 + $0x8] sm:$0xff] %vm64, %v185
      %190 = vst.msk [vmem:[#allocation8 + $0x10] sm:$0xff] %vm64, %v186
      %191 = vst.msk [vmem:[#allocation8 + $0x18] sm:$0xff] %vm64, %v187
    $region29: #{tpu_custom_call.1} parent=1 // pred_fallthru
      _
    // Predicated region
    $region30: #{tpu_custom_call.1} parent=1 // pred_check
      _
    $region31: #{tpu_custom_call.1} parent=1 // pred_check_branch
      %193 = sbr.rel (0) target = $region33
    $region32: #{tpu_custom_call.1} parent=1 // pred_region
      %s195 = ssub.s32 512, 512
      %196 = vsyncadd [#allocation5], %s195
      %s197 = sshll.u32 [#allocation8], 4
      %s198 = int_to_ptr.vmem [resolvable:$true] %s197
      %203 = dma.vmem_to_hbm [thread:$0]  %s198, 512, %s3, [#allocation5], 128, 128, 8
    $region33: #{tpu_custom_call.1} parent=1 // pred_fallthru
      _
    // Predicated region
    $region34: #{tpu_custom_call.1} parent=1 // pred_check
      _
    $region35: #{tpu_custom_call.1} parent=1 // pred_check_branch
      %205 = sbr.rel (0) target = $region37
    $region36: #{tpu_custom_call.1} parent=1 // pred_region
      %206 = dma.done [#allocation5], 512
    $region37: #{tpu_custom_call.1} parent=1 // pred_fallthru
      _
    %207 = vsyncpa [#allocation4], 1
    %208 = vsyncpa [#allocation7], 1
    %209 = vsyncpa [#allocation5], 1

</llo_original>
